<compile_context>
chip_gen: v7x
topology: tpu7x:2x2x1
jax: 0.10.0
libtpu: 0.0.40
codegen_flags: <defaults>
</compile_context>

<pallas_src>
import functools

import jax
import jax.numpy as jnp
from jax.experimental import pallas as pl
from jax.experimental.pallas import tpu as pltpu


def _round_down(x, m):
    return (x // m) * m


def _round_up(x, m):
    return -(-x // m) * m


def _vmem_capacity_bytes():
    try:
        return int(pltpu.get_tpu_info().vmem_capacity_bytes)
    except Exception:
        return 64 * 1024 * 1024  # conservative fallback (v7x per-core VMEM)


# ----------------------------------------------------------------------------
# Mode A: fused pooling + MLP. grid = (batch tiles [parallel], HW tiles [arb]).
# ----------------------------------------------------------------------------
def _fused_kernel(x_ref, w1t_ref, w2t_ref, o_ref, sum_acc, max_acc, *,
                  hw_total, hw_tile, mask_tail):
    k = pl.program_id(1)
    n_k = pl.num_programs(1)

    @pl.when(k == 0)
    def _init():
        sum_acc[...] = jnp.zeros_like(sum_acc)
        max_acc[...] = jnp.full_like(max_acc, -jnp.inf)

    x = x_ref[...]  # (TB, C, HW_TILE)

    def _accum_unmasked():
        sum_acc[...] += jnp.sum(x.astype(jnp.float32), axis=-1)
        max_acc[...] = jnp.maximum(max_acc[...],
                                   jnp.max(x, axis=-1).astype(jnp.float32))

    def _accum_masked():
        lane = jax.lax.broadcasted_iota(jnp.int32, x.shape, 2)
        valid = (k * hw_tile + lane) < hw_total
        zero = jnp.zeros((), x.dtype)
        ninf = jnp.array(-jnp.inf, x.dtype)
        sum_acc[...] += jnp.sum(jnp.where(valid, x, zero).astype(jnp.float32),
                                axis=-1)
        max_acc[...] = jnp.maximum(
            max_acc[...],
            jnp.max(jnp.where(valid, x, ninf), axis=-1).astype(jnp.float32))

    if mask_tail:
        # Only the last HW tile pays the masking cost.
        pl.when(k < n_k - 1)(_accum_unmasked)
        pl.when(k == n_k - 1)(_accum_masked)
    else:
        _accum_unmasked()

    @pl.when(k == n_k - 1)
    def _finalize():
        avg_pool = sum_acc[...] * jnp.float32(1.0 / hw_total)  # (TB, C)
        max_pool = max_acc[...]                                 # (TB, C)
        w1t = w1t_ref[...].astype(jnp.float32)                  # (C, Cr)
        w2t = w2t_ref[...].astype(jnp.float32)                  # (Cr, C)

        def mlp(p):
            h = jnp.dot(p, w1t, preferred_element_type=jnp.float32)
            h = jnp.maximum(h, 0.0)
            return jnp.dot(h, w2t, preferred_element_type=jnp.float32)

        o_ref[...] = jax.nn.sigmoid(mlp(avg_pool) + mlp(max_pool)).astype(o_ref.dtype)


# ----------------------------------------------------------------------------
# Mode B: single batch tile -> split the HW reduction across a size-2
# "parallel" axis (keeps v7x's second TensorCore busy). Emits partial pools.
# ----------------------------------------------------------------------------
def _split_pool_kernel(x_ref, psum_ref, pmax_ref, sum_acc, max_acc, *,
                       hw_total, hw_tile, n_k_total, k_per_chunk):
    p = pl.program_id(0)
    k = pl.program_id(1)
    g = p * k_per_chunk + k  # logical (unclamped) HW-tile index

    @pl.when(k == 0)
    def _init():
        sum_acc[...] = jnp.zeros_like(sum_acc)
        max_acc[...] = jnp.full_like(max_acc, -jnp.inf)

    x = x_ref[...]  # (N, C, HW_TILE)

    @pl.when(g < n_k_total - 1)
    def _accum_unmasked():
        sum_acc[...] += jnp.sum(x.astype(jnp.float32), axis=-1)
        max_acc[...] = jnp.maximum(max_acc[...],
                                   jnp.max(x, axis=-1).astype(jnp.float32))

    @pl.when(g >= n_k_total - 1)
    def _accum_masked():
        # Last real tile (possibly partial) and any fully out-of-range slot of
        # the second chunk: mask by the *logical* HW position.
        lane = jax.lax.broadcasted_iota(jnp.int32, x.shape, 2)
        valid = (g * hw_tile + lane) < hw_total
        zero = jnp.zeros((), x.dtype)
        ninf = jnp.array(-jnp.inf, x.dtype)
        sum_acc[...] += jnp.sum(jnp.where(valid, x, zero).astype(jnp.float32),
                                axis=-1)
        max_acc[...] = jnp.maximum(
            max_acc[...],
            jnp.max(jnp.where(valid, x, ninf), axis=-1).astype(jnp.float32))

    @pl.when(k == k_per_chunk - 1)
    def _finalize():
        psum_ref[...] = sum_acc[...]
        pmax_ref[...] = max_acc[...]


# ----------------------------------------------------------------------------
# Wrapper
# ----------------------------------------------------------------------------
def channel_attention(x, w1, w2, *, target_tile_bytes=None, hw_tile=None):
    """x: (N, C, H, W); w1: (Cr, C) fc1 weight; w2: (C, Cr) fc2 weight.

    Returns the sigmoid channel-attention map of shape (N, C, 1, 1), matching
    the PyTorch ChannelAttention forward. `hw_tile` (multiple of 128) is an
    optional explicit HW tile, mainly for testing.
    """
    N, C, H, W = x.shape
    Cr = w1.shape[0]
    assert w1.shape == (Cr, C) and w2.shape == (C, Cr)
    assert jnp.issubdtype(x.dtype, jnp.floating), "-inf mask fill needs float x"
    HW = H * W

    x_flat = x.reshape(N, C, HW)
    w1t = jnp.transpose(w1)  # (C, Cr)
    w2t = jnp.transpose(w2)  # (Cr, C)
    itemsize = jnp.dtype(x.dtype).itemsize

    # Batch tile: leading block dim; full batch if N <= 8, else sublane-dense 8.
    tb = N if N <= 8 else 8
    n_batch_tiles = pl.cdiv(N, tb)

    # Generation-aware VMEM budget (v5e/v6e: 128 MiB, v7x: 64 MiB per core).
    vmem_cap = _vmem_capacity_bytes()
    vmem_limit = int(min(vmem_cap // 2, 64 * 1024 * 1024))
    reserve = 2 * 1024 * 1024  # weights, scratch, output, headroom
    # Per byte of x block: 2x (double buffer) + f32 compute temp + mask temp.
    temp_factor = 2.0 + 4.0 / itemsize + 1.0
    hard_tile_bytes = max(int((vmem_limit - reserve) / temp_factor), 128 * 1024)

    if hw_tile is None:
        if target_tile_bytes is None:
            # ~8 MiB slabs; ~12 MiB on chips with >= 96 MiB VMEM (v5e/v6e).
            target_tile_bytes = 12 * 2**20 if vmem_cap >= 96 * 2**20 else 8 * 2**20
        tile_bytes = min(target_tile_bytes, hard_tile_bytes)

        row_bytes = tb * C * itemsize  # bytes per HW element in a block
        budget_hw = max(128, _round_down(tile_bytes // row_bytes, 128))
        hard_hw = max(128, _round_down(hard_tile_bytes // row_bytes, 128))
        seg_floor = max(128, _round_up(2048 // itemsize, 128))  # >= ~2 KiB rows
        hw_tile = min(max(budget_hw, seg_floor), hard_hw)

        if n_batch_tiles == 1 and HW >= 2 * max(seg_floor, 1024):
            # Only one "parallel" batch tile: force >= 2 HW tiles so the
            # reduction can shard across TensorCores on v7x.
            hw_tile = min(hw_tile, _round_up((HW + 1) // 2, 128))

    hw_tile = min(int(hw_tile), HW)  # full extent => no (8,128) issue, no mask
    n_k = pl.cdiv(HW, hw_tile)
    mask_tail = (HW % hw_tile) != 0

    cost = pl.CostEstimate(
        flops=3 * N * C * HW + 8 * N * C * Cr,
        transcendentals=N * C,
        bytes_accessed=(N * C * HW * itemsize
                        + 2 * C * Cr * jnp.dtype(w1.dtype).itemsize
                        + N * C * itemsize))
    cparams = pltpu.CompilerParams(
        dimension_semantics=("parallel", "arbitrary"),
        vmem_limit_bytes=vmem_limit)

    use_split = (n_batch_tiles == 1) and (n_k >= 2)

    if not use_split:
        kernel = functools.partial(_fused_kernel, hw_total=HW, hw_tile=hw_tile,
                                   mask_tail=mask_tail)
        out = pl.pallas_call(
            kernel,
            out_shape=jax.ShapeDtypeStruct((N, C), x.dtype),
            grid_spec=pltpu.PrefetchScalarGridSpec(
                num_scalar_prefetch=0,
                grid=(n_batch_tiles, n_k),
                in_specs=[
                    pl.BlockSpec((tb, C, hw_tile), lambda n, k: (n, 0, k)),
                    pl.BlockSpec((C, Cr), lambda n, k: (0, 0)),
                    pl.BlockSpec((Cr, C), lambda n, k: (0, 0)),
                ],
                out_specs=pl.BlockSpec((tb, C), lambda n, k: (n, 0)),
                scratch_shapes=[pltpu.VMEM((tb, C), jnp.float32),
                                pltpu.VMEM((tb, C), jnp.float32)],
            ),
            compiler_params=cparams,
            cost_estimate=cost,
        )(x_flat, w1t, w2t)
        return out.reshape(N, C, 1, 1)

    # Mode B: split reduction over 2 parallel HW chunks + tiny XLA epilogue.
    n_chunks = 2
    k_per_chunk = pl.cdiv(n_k, n_chunks)

    def x_map(p, k):
        # Clamp so fully out-of-range slots re-read the last real tile (their
        # contribution is masked out in-kernel by the logical position).
        return (0, 0, jnp.minimum(p * k_per_chunk + k, n_k - 1))

    kernel = functools.partial(_split_pool_kernel, hw_total=HW, hw_tile=hw_tile,
                               n_k_total=n_k, k_per_chunk=k_per_chunk)
    psum, pmax = pl.pallas_call(
        kernel,
        out_shape=(jax.ShapeDtypeStruct((n_chunks, N, C), jnp.float32),
                   jax.ShapeDtypeStruct((n_chunks, N, C), jnp.float32)),
        grid_spec=pltpu.PrefetchScalarGridSpec(
            num_scalar_prefetch=0,
            grid=(n_chunks, k_per_chunk),
            in_specs=[pl.BlockSpec((tb, C, hw_tile), x_map)],
            out_specs=[pl.BlockSpec((None, tb, C), lambda p, k: (p, 0, 0)),
                       pl.BlockSpec((None, tb, C), lambda p, k: (p, 0, 0))],
            scratch_shapes=[pltpu.VMEM((tb, C), jnp.float32),
                            pltpu.VMEM((tb, C), jnp.float32)],
        ),
        compiler_params=cparams,
        cost_estimate=cost,
    )(x_flat)

    # O(N*C*Cr) epilogue — negligible; left to plain XLA per the perf review.
    avg_pool = jnp.sum(psum, axis=0) * jnp.float32(1.0 / HW)
    max_pool = jnp.max(pmax, axis=0)
    w1t32 = w1t.astype(jnp.float32)
    w2t32 = w2t.astype(jnp.float32)

    def mlp(pool):
        return jnp.maximum(pool @ w1t32, 0.0) @ w2t32

    out = jax.nn.sigmoid(mlp(avg_pool) + mlp(max_pool)).astype(x.dtype)
    return out.reshape(N, C, 1, 1)


def _reference(x, w1, w2):
    # Pure-JAX reference replicating the PyTorch forward.
    avg = jnp.mean(x, axis=(2, 3))
    mx = jnp.max(x, axis=(2, 3))

    def mlp(p):
        return jnp.maximum(p @ w1.T, 0.0) @ w2.T

    return jax.nn.sigmoid(mlp(avg) + mlp(mx))[:, :, None, None]


if __name__ == "__main__":
    key = jax.random.PRNGKey(0)

    def run_case(N, C, H, W, ratio=16, **kw):
        Cr = max(C // ratio, 1)
        kx, k1, k2 = jax.random.split(jax.random.fold_in(key, N * 10000 + H), 3)
        x = jax.random.normal(kx, (N, C, H, W), dtype=jnp.float32)
        # fc1.weight: (Cr, C, 1, 1) -> (Cr, C); fc2.weight: (C, Cr, 1, 1) -> (C, Cr)
        w1 = jax.random.normal(k1, (Cr, C), dtype=jnp.float32) * 0.1
        w2 = jax.random.normal(k2, (C, Cr), dtype=jnp.float32) * 0.1
        out = channel_attention(x, w1, w2, **kw)
        jax.block_until_ready(out)
        ref = _reference(x, w1, w2)
        assert out.shape == (N, C, 1, 1)
        assert jnp.allclose(out, ref, atol=1e-5, rtol=1e-5), (
            f"mismatch for shape {(N, C, H, W)} kwargs={kw}")

    # Primary small shape (module default ratio=16 -> C=32 gives hidden Cr=2).
    run_case(2, 32, 16, 16)
    # Exercise HW tiling + gated tail masking + the split-reduction (megacore) path.
    run_case(2, 32, 24, 24, hw_tile=256)
    # Exercise multiple batch tiles (N > 8, partial last batch tile) + masking.
    run_case(9, 32, 24, 24, hw_tile=256)

    print("KERNEL_OK")
</pallas_src>

<mosaic_0001>
module attributes {stable_mosaic.version = 11 : i64} {
  func.func @_fused_kernel(%arg0: i32, %arg1: i32, %arg2: memref<2x32x256xf32, #tpu.memory_space<vmem>>, %arg3: memref<32x2xf32, #tpu.memory_space<vmem>>, %arg4: memref<2x32xf32, #tpu.memory_space<vmem>>, %arg5: memref<2x32xf32, #tpu.memory_space<vmem>>, %arg6: memref<2x32xf32, #tpu.memory_space<vmem>>, %arg7: memref<2x32xf32, #tpu.memory_space<vmem>>) attributes {dimension_semantics = [#tpu.dimension_semantics<parallel>, #tpu.dimension_semantics<arbitrary>], iteration_bounds = array<i64: 1, 1>, scalar_prefetch = 0 : i64, scratch_operands = 2 : i64, tpu.core_type = #tpu.core_type<tc>, window_params = [{transform_indices = @transform_0, window_bounds = array<i64: 2, 32, 256>}, {pipeline_mode = #tpu.pipeline_mode<synchronous>, transform_indices = @transform_1, window_bounds = array<i64: 32, 2>}, {pipeline_mode = #tpu.pipeline_mode<synchronous>, transform_indices = @transform_2, window_bounds = array<i64: 2, 32>}, {transform_indices = @transform_3, window_bounds = array<i64: 2, 32>}]} {
    %c0_i32 = arith.constant 0 : i32
    %0 = arith.cmpi eq, %arg1, %c0_i32 : i32
    %1 = arith.extui %0 : i1 to i32
    %c0_i32_0 = arith.constant 0 : i32
    %2 = arith.cmpi ne, %1, %c0_i32_0 : i32
    scf.if %2 {
      %cst_14 = arith.constant 0.000000e+00 : f32
      %15 = vector.broadcast %cst_14 : f32 to vector<2x32xf32>
      %c0_15 = arith.constant 0 : index
      %c0_16 = arith.constant 0 : index
      %16 = vector.load %arg6[%c0_15, %c0_16] : memref<2x32xf32, #tpu.memory_space<vmem>>, vector<2x32xf32>
      tpu.vector_store %arg6[%c0_15, %c0_16], %15 {strides = array<i32>} : memref<2x32xf32, #tpu.memory_space<vmem>>, vector<2x32xf32>,
      %cst_17 = arith.constant 0xFF800000 : f32
      %17 = vector.broadcast %cst_17 : f32 to vector<2x32xf32>
      %c0_18 = arith.constant 0 : index
      %c0_19 = arith.constant 0 : index
      %18 = vector.load %arg7[%c0_18, %c0_19] : memref<2x32xf32, #tpu.memory_space<vmem>>, vector<2x32xf32>
      tpu.vector_store %arg7[%c0_18, %c0_19], %17 {strides = array<i32>} : memref<2x32xf32, #tpu.memory_space<vmem>>, vector<2x32xf32>,
    } else {
    }
    %c0 = arith.constant 0 : index
    %c0_1 = arith.constant 0 : index
    %c0_2 = arith.constant 0 : index
    %3 = vector.load %arg2[%c0, %c0_1, %c0_2] : memref<2x32x256xf32, #tpu.memory_space<vmem>>, vector<2x32x256xf32>
    %c0_3 = arith.constant 0 : index
    %c0_4 = arith.constant 0 : index
    %4 = vector.load %arg6[%c0_3, %c0_4] : memref<2x32xf32, #tpu.memory_space<vmem>>, vector<2x32xf32>
    %cst = arith.constant dense<0.000000e+00> : vector<2x32xf32>
    %5 = vector.multi_reduction <add>, %3, %cst [2] : vector<2x32x256xf32> to vector<2x32xf32>
    %6 = arith.addf %4, %5 : vector<2x32xf32>
    %c0_5 = arith.constant 0 : index
    %c0_6 = arith.constant 0 : index
    %7 = vector.load %arg6[%c0_5, %c0_6] : memref<2x32xf32, #tpu.memory_space<vmem>>, vector<2x32xf32>
    tpu.vector_store %arg6[%c0_5, %c0_6], %6 {strides = array<i32>} : memref<2x32xf32, #tpu.memory_space<vmem>>, vector<2x32xf32>,
    %c0_7 = arith.constant 0 : index
    %c0_8 = arith.constant 0 : index
    %8 = vector.load %arg7[%c0_7, %c0_8] : memref<2x32xf32, #tpu.memory_space<vmem>>, vector<2x32xf32>
    %cst_9 = arith.constant dense<0xFF800000> : vector<2x32xf32>
    %9 = vector.multi_reduction <maximumf>, %3, %cst_9 [2] : vector<2x32x256xf32> to vector<2x32xf32>
    %10 = arith.maximumf %8, %9 : vector<2x32xf32>
    %c0_10 = arith.constant 0 : index
    %c0_11 = arith.constant 0 : index
    %11 = vector.load %arg7[%c0_10, %c0_11] : memref<2x32xf32, #tpu.memory_space<vmem>>, vector<2x32xf32>
    tpu.vector_store %arg7[%c0_10, %c0_11], %10 {strides = array<i32>} : memref<2x32xf32, #tpu.memory_space<vmem>>, vector<2x32xf32>,
    %c0_i32_12 = arith.constant 0 : i32
    %12 = arith.cmpi eq, %arg1, %c0_i32_12 : i32
    %13 = arith.extui %12 : i1 to i32
    %c0_i32_13 = arith.constant 0 : i32
    %14 = arith.cmpi ne, %13, %c0_i32_13 : i32
    scf.if %14 {
      %c0_14 = arith.constant 0 : index
      %c0_15 = arith.constant 0 : index
      %15 = vector.load %arg6[%c0_14, %c0_15] : memref<2x32xf32, #tpu.memory_space<vmem>>, vector<2x32xf32>
      %cst_16 = arith.constant 3.906250e-03 : f32
      %16 = vector.broadcast %cst_16 : f32 to vector<2x32xf32>
      %17 = arith.mulf %15, %16 : vector<2x32xf32>
      %c0_17 = arith.constant 0 : index
      %c0_18 = arith.constant 0 : index
      %18 = vector.load %arg7[%c0_17, %c0_18] : memref<2x32xf32, #tpu.memory_space<vmem>>, vector<2x32xf32>
      %c0_19 = arith.constant 0 : index
      %c0_20 = arith.constant 0 : index
      %19 = vector.load %arg3[%c0_19, %c0_20] : memref<32x2xf32, #tpu.memory_space<vmem>>, vector<32x2xf32>
      %c0_21 = arith.constant 0 : index
      %c0_22 = arith.constant 0 : index
      %20 = vector.load %arg4[%c0_21, %c0_22] : memref<2x32xf32, #tpu.memory_space<vmem>>, vector<2x32xf32>
      %cst_23 = arith.constant dense<0.000000e+00> : vector<2x2xf32>
      %21 = tpu.matmul %17, %19, %cst_23 {dimension_numbers = #tpu.dot_dimension_numbers<[1], [0], [0], [1], [0, 0, 1, 1], [], []>} : vector<2x32xf32>, vector<32x2xf32>, vector<2x2xf32> -> vector<2x2xf32>
      %cst_24 = arith.constant 0.000000e+00 : f32
      %22 = vector.broadcast %cst_24 : f32 to vector<2x2xf32>
      %23 = arith.maximumf %21, %22 : vector<2x2xf32>
      %cst_25 = arith.constant dense<0.000000e+00> : vector<2x32xf32>
      %24 = tpu.matmul %23, %20, %cst_25 {dimension_numbers = #tpu.dot_dimension_numbers<[1], [0], [0], [1], [0, 0, 1, 1], [], []>} : vector<2x2xf32>, vector<2x32xf32>, vector<2x32xf32> -> vector<2x32xf32>
      %cst_26 = arith.constant dense<0.000000e+00> : vector<2x2xf32>
      %25 = tpu.matmul %18, %19, %cst_26 {dimension_numbers = #tpu.dot_dimension_numbers<[1], [0], [0], [1], [0, 0, 1, 1], [], []>} : vector<2x32xf32>, vector<32x2xf32>, vector<2x2xf32> -> vector<2x2xf32>
      %cst_27 = arith.constant 0.000000e+00 : f32
      %26 = vector.broadcast %cst_27 : f32 to vector<2x2xf32>
      %27 = arith.maximumf %25, %26 : vector<2x2xf32>
      %cst_28 = arith.constant dense<0.000000e+00> : vector<2x32xf32>
      %28 = tpu.matmul %27, %20, %cst_28 {dimension_numbers = #tpu.dot_dimension_numbers<[1], [0], [0], [1], [0, 0, 1, 1], [], []>} : vector<2x2xf32>, vector<2x32xf32>, vector<2x32xf32> -> vector<2x32xf32>
      %29 = arith.addf %24, %28 : vector<2x32xf32>
      %30 = arith.negf %29 : vector<2x32xf32>
      %31 = math.exp %30 : vector<2x32xf32>
      %cst_29 = arith.constant 1.000000e+00 : f32
      %32 = vector.broadcast %cst_29 : f32 to vector<2x32xf32>
      %33 = arith.addf %32, %31 : vector<2x32xf32>
      %34 = arith.divf %32, %33 : vector<2x32xf32>
      %c0_30 = arith.constant 0 : index
      %c0_31 = arith.constant 0 : index
      %35 = vector.load %arg5[%c0_30, %c0_31] : memref<2x32xf32, #tpu.memory_space<vmem>>, vector<2x32xf32>
      tpu.vector_store %arg5[%c0_30, %c0_31], %34 {strides = array<i32>} : memref<2x32xf32, #tpu.memory_space<vmem>>, vector<2x32xf32>,
    } else {
    }
    return
  }
  func.func @transform_0(%arg0: i32, %arg1: i32) -> (i32, i32, i32) {
    %c0_i32 = arith.constant 0 : i32
    %c0_i32_0 = arith.constant 0 : i32
    return %arg0, %c0_i32, %arg1 : i32, i32, i32
  }
  func.func @transform_1(%arg0: i32, %arg1: i32) -> (i32, i32) {
    %c0_i32 = arith.constant 0 : i32
    %c0_i32_0 = arith.constant 0 : i32
    %c0_i32_1 = arith.constant 0 : i32
    return %c0_i32, %c0_i32_0 : i32, i32
  }
  func.func @transform_2(%arg0: i32, %arg1: i32) -> (i32, i32) {
    %c0_i32 = arith.constant 0 : i32
    %c0_i32_0 = arith.constant 0 : i32
    %c0_i32_1 = arith.constant 0 : i32
    return %c0_i32, %c0_i32_0 : i32, i32
  }
  func.func @transform_3(%arg0: i32, %arg1: i32) -> (i32, i32) {
    %c0_i32 = arith.constant 0 : i32
    %c0_i32_0 = arith.constant 0 : i32
    return %arg0, %c0_i32 : i32, i32
  }
}

</mosaic_0001>

<llo_original>
// kernel: tpu_custom_call.1
$region0: #{tpu_custom_call.1}
  #allocation0 [shape = 'u32[]', space=smem, size = 0x4, offset = 0x4, fixed_abs, tag = 'smem constant byte address 0x4 - core index']
  #allocation1 [shape = 'u32[144,128]{1,0:T(1,128)}', space=vmem, size = 0x12000, scoped, tag = 'internal scratch']
  #allocation2 [shape = 'f32[2,32]{1,0:T(2,128)}', space=vmem, size = 0x400, scoped, tag = 'scratch operand']
  #allocation3 [shape = 'f32[2,32]{1,0:T(2,128)}', space=vmem, size = 0x400, scoped, tag = 'scratch operand']
  %s0 = inlined_call_operand.hbm [shape: f32[2,32,256], index: 0, kind: input, shape index: {}]
  %s1 = inlined_call_operand.vmem [shape: f32[32,2], index: 1, kind: input, shape index: {}]
  %s2 = inlined_call_operand.vmem [shape: f32[2,32], index: 2, kind: input, shape index: {}]
  %s3 = inlined_call_operand.hbm [shape: f32[2,32], index: 3, kind: output, shape index: {}]
  %s4 = sld [smem:[#allocation0]]
  $region34: #{tpu_custom_call.1} parent=0
    _
  %s6 = ssub.s32 1, %s4
  %s7 = scalar_select 0, %s6, %s4
  $region1: #{tpu_custom_call.1} parent=0
    #allocation4 [shape = 'u8[65536]{0}', space=vmem, size = 0x10000, scoped, tag = 'input window, operand 0, single buffered']
    #allocation5 [shape = 's32[1]{0}', space=sflag, size = 0x4, scoped, tag = 'scoped memory for tpu_custom_call.1']
    #allocation6 [shape = 's32[1]{0}', space=sflag, size = 0x4, scoped, tag = 'scoped memory for tpu_custom_call.1']
    #allocation7 [shape = 'u8[1024]{0}', space=vmem, size = 0x400, scoped, tag = 'output window, operand 0, single buffered']
    %8 = vsyncpa [#allocation5], 0
    %9 = vsyncpa [#allocation6], 0
    // Predicated region
    $region2: #{tpu_custom_call.1} parent=1 // pred_check
      _
    $region3: #{tpu_custom_call.1} parent=1 // pred_check_branch
      %11 = sbr.rel (0) target = $region5
    $region4: #{tpu_custom_call.1} parent=1 // pred_region
      %s13 = ssub.s32 2048, 2048
      %14 = vsyncadd [#allocation5], %s13
      %s15 = sshll.u32 [#allocation4], 4
      %s16 = int_to_ptr.vmem [resolvable:$true] %s15
      %21 = dma.hbm_to_vmem [thread:$0]  %s0, 2048, %s16, [#allocation5], 256, 256, 16
    $region5: #{tpu_custom_call.1} parent=1 // pred_fallthru
      _
    // Predicated region
    $region6: #{tpu_custom_call.1} parent=1 // pred_check
      _
    $region7: #{tpu_custom_call.1} parent=1 // pred_check_branch
      %23 = sbr.rel (0) target = $region9
    $region8: #{tpu_custom_call.1} parent=1 // pred_region
      _
    $region9: #{tpu_custom_call.1} parent=1 // pred_fallthru
      _
    // Predicated region
    $region10: #{tpu_custom_call.1} parent=1 // pred_check
      _
    $region11: #{tpu_custom_call.1} parent=1 // pred_check_branch
      %25 = sbr.rel (0) target = $region13
    $region12: #{tpu_custom_call.1} parent=1 // pred_region
      _
    $region13: #{tpu_custom_call.1} parent=1 // pred_fallthru
      _
    // Predicated region
    $region14: #{tpu_custom_call.1} parent=1 // pred_check
      _
    $region15: #{tpu_custom_call.1} parent=1 // pred_check_branch
      %27 = sbr.rel (0) target = $region17
    $region16: #{tpu_custom_call.1} parent=1 // pred_region
      %28 = dma.done [#allocation5], 2048
    $region17: #{tpu_custom_call.1} parent=1 // pred_fallthru
      _
    %p29 = scmp.eq.s32.totalorder 0, 0
    // Predicated region
    $region18: #{tpu_custom_call.1} parent=1 // pred_check
      %p30 = pneg %p29
    $region19: #{tpu_custom_call.1} parent=1 // pred_check_branch
      %32 = sbr.rel (%p30) target = $region21
    $region20: #{tpu_custom_call.1} parent=1 // pred_region
      %vm33 = vcmask 254976
      %34 = vst.msk [vmem:[#allocation2] sm:$0x3] %vm33, 0.0
      %35 = vst.msk [vmem:[#allocation3] sm:$0x3] %vm33, -inf
    $region21: #{tpu_custom_call.1} parent=1 // pred_fallthru
      _
    %v36 = vld [vmem:[#allocation4] sm:$0xff]
    %v37 = vld [vmem:[#allocation4 + $0x8] sm:$0xff]
    %v38 = vld [vmem:[#allocation4 + $0x10] sm:$0xff]
    %v39 = vld [vmem:[#allocation4 + $0x18] sm:$0xff]
    %v40 = vld [vmem:[#allocation4 + $0x20] sm:$0xff]
    %v41 = vld [vmem:[#allocation4 + $0x28] sm:$0xff]
    %v42 = vld [vmem:[#allocation4 + $0x30] sm:$0xff]
    %v43 = vld [vmem:[#allocation4 + $0x38] sm:$0xff]
    %v44 = vld [vmem:[#allocation4 + $0x40] sm:$0xff]
    %v45 = vld [vmem:[#allocation4 + $0x48] sm:$0xff]
    %v46 = vld [vmem:[#allocation4 + $0x50] sm:$0xff]
    %v47 = vld [vmem:[#allocation4 + $0x58] sm:$0xff]
    %v48 = vld [vmem:[#allocation4 + $0x60] sm:$0xff]
    %v49 = vld [vmem:[#allocation4 + $0x68] sm:$0xff]
    %v50 = vld [vmem:[#allocation4 + $0x70] sm:$0xff]
    %v51 = vld [vmem:[#allocation4 + $0x78] sm:$0xff]
    %v52 = vld [vmem:[#allocation2] sm:$0x3]
    %v53 = vadd.f32 %v36, %v37
    %54 = vadd.xlane.f32.xlu0 %v53
    %v55 = vpop.xlane.xlu0 %54
    %v56 = vadd.f32 %v38, %v39
    %57 = vadd.xlane.f32.xlu0 %v56
    %v58 = vpop.xlane.xlu0 %57
    %v59 = vadd.f32 %v40, %v41
    %60 = vadd.xlane.f32.xlu0 %v59
    %v61 = vpop.xlane.xlu0 %60
    %v62 = vadd.f32 %v42, %v43
    %63 = vadd.xlane.f32.xlu0 %v62
    %v64 = vpop.xlane.xlu0 %63
    %v65 = vadd.f32 %v44, %v45
    %66 = vadd.xlane.f32.xlu0 %v65
    %v67 = vpop.xlane.xlu0 %66
    %v68 = vadd.f32 %v46, %v47
    %69 = vadd.xlane.f32.xlu0 %v68
    %v70 = vpop.xlane.xlu0 %69
    %v71 = vadd.f32 %v48, %v49
    %72 = vadd.xlane.f32.xlu0 %v71
    %v73 = vpop.xlane.xlu0 %72
    %v74 = vadd.f32 %v50, %v51
    %75 = vadd.xlane.f32.xlu0 %v74
    %v76 = vpop.xlane.xlu0 %75
    %v85 = vlaneseq
    %v86 = vand.u32 %v85, 127
    %v87 = vlaneseq
    %v88 = vshrl.u32 %v87, 7
    %v89 = vsub.s32 %v86, %v88
    %v90 = vrot.slane %v55, %v89
    %v91 = vadd.s32 %v86, 4294967288
    %v92 = vlaneseq
    %v93 = vshrl.u32 %v92, 7
    %v94 = vsub.s32 %v91, %v93
    %v95 = vrot.slane %v58, %v94
    %vm96 = vcmask 130112
    %v97 = vsel %vm96, %v95, %v90
    %v98 = vadd.s32 %v86, 4294967280
    %v99 = vlaneseq
    %v100 = vshrl.u32 %v99, 7
    %v101 = vsub.s32 %v98, %v100
    %v102 = vrot.slane %v61, %v101
    %vm103 = vcmask 195712
    %v104 = vsel %vm103, %v102, %v97
    %v105 = vadd.s32 %v86, 4294967272
    %v106 = vlaneseq
    %v107 = vshrl.u32 %v106, 7
    %v108 = vsub.s32 %v105, %v107
    %v109 = vrot.slane %v64, %v108
    %vm110 = vcmask 261312
    %v111 = vsel %vm110, %v109, %v104
    %v112 = vlaneseq
    %v113 = vshrl.u32 %v112, 7
    %v114 = vsub.s32 %v86, %v113
    %v115 = vrot.slane %v67, %v114
    %v116 = vlaneseq
    %v117 = vshrl.u32 %v116, 7
    %v118 = vsub.s32 %v91, %v117
    %v119 = vrot.slane %v70, %v118
    %v120 = vsel %vm96, %v119, %v115
    %v121 = vlaneseq
    %v122 = vshrl.u32 %v121, 7
    %v123 = vsub.s32 %v98, %v122
    %v124 = vrot.slane %v73, %v123
    %v125 = vsel %vm103, %v124, %v120
    %v126 = vlaneseq
    %v127 = vshrl.u32 %v126, 7
    %v128 = vsub.s32 %v105, %v127
    %v129 = vrot.slane %v76, %v128
    %v130 = vsel %vm110, %v129, %v125
    %vm131 = vcmask 1041409
    %v132 = vsel %vm131, %v130, %v111
    %v134 = vadd.f32 %v52, %v132
    %vm135 = vcmask 254976
    %136 = vst.msk [vmem:[#allocation2] sm:$0x3] %vm135, %v134
    %v137 = vld [vmem:[#allocation3] sm:$0x3]
    %v138 = vmax.f32 %v36, %v37
    %139 = vmax.xlane.f32.xlu0 %v138
    %v140 = vpop.xlane.xlu0 %139
    %v141 = vmax.f32 %v38, %v39
    %142 = vmax.xlane.f32.xlu0 %v141
    %v143 = vpop.xlane.xlu0 %142
    %v144 = vmax.f32 %v40, %v41
    %145 = vmax.xlane.f32.xlu0 %v144
    %v146 = vpop.xlane.xlu0 %145
    %v147 = vmax.f32 %v42, %v43
    %148 = vmax.xlane.f32.xlu0 %v147
    %v149 = vpop.xlane.xlu0 %148
    %v150 = vmax.f32 %v44, %v45
    %151 = vmax.xlane.f32.xlu0 %v150
    %v152 = vpop.xlane.xlu0 %151
    %v153 = vmax.f32 %v46, %v47
    %154 = vmax.xlane.f32.xlu0 %v153
    %v155 = vpop.xlane.xlu0 %154
    %v156 = vmax.f32 %v48, %v49
    %157 = vmax.xlane.f32.xlu0 %v156
    %v158 = vpop.xlane.xlu0 %157
    %v159 = vmax.f32 %v50, %v51
    %160 = vmax.xlane.f32.xlu0 %v159
    %v161 = vpop.xlane.xlu0 %160
    %v170 = vlaneseq
    %v171 = vshrl.u32 %v170, 7
    %v172 = vsub.s32 %v86, %v171
    %v173 = vrot.slane %v140, %v172
    %v174 = vlaneseq
    %v175 = vshrl.u32 %v174, 7
    %v176 = vsub.s32 %v91, %v175
    %v177 = vrot.slane %v143, %v176
    %v178 = vsel %vm96, %v177, %v173
    %v179 = vlaneseq
    %v180 = vshrl.u32 %v179, 7
    %v181 = vsub.s32 %v98, %v180
    %v182 = vrot.slane %v146, %v181
    %v183 = vsel %vm103, %v182, %v178
    %v184 = vlaneseq
    %v185 = vshrl.u32 %v184, 7
    %v186 = vsub.s32 %v105, %v185
    %v187 = vrot.slane %v149, %v186
    %v188 = vsel %vm110, %v187, %v183
    %v189 = vlaneseq
    %v190 = vshrl.u32 %v189, 7
    %v191 = vsub.s32 %v86, %v190
    %v192 = vrot.slane %v152, %v191
    %v193 = vlaneseq
    %v194 = vshrl.u32 %v193, 7
    %v195 = vsub.s32 %v91, %v194
    %v196 = vrot.slane %v155, %v195
    %v197 = vsel %vm96, %v196, %v192
    %v198 = vlaneseq
    %v199 = vshrl.u32 %v198, 7
    %v200 = vsub.s32 %v98, %v199
    %v201 = vrot.slane %v158, %v200
    %v202 = vsel %vm103, %v201, %v197
    %v203 = vlaneseq
    %v204 = vshrl.u32 %v203, 7
    %v205 = vsub.s32 %v105, %v204
    %v206 = vrot.slane %v161, %v205
    %v207 = vsel %vm110, %v206, %v202
    %v208 = vsel %vm131, %v207, %v188
    %v210 = vmax.f32 %v137, %v208
    %211 = vst.msk [vmem:[#allocation3] sm:$0x3] %vm135, %v210
    // Predicated region
    $region22: #{tpu_custom_call.1} parent=1 // pred_check
      %p212 = pneg %p29
    $region23: #{tpu_custom_call.1} parent=1 // pred_check_branch
      %214 = sbr.rel (%p212) target = $region25
    $region24: #{tpu_custom_call.1} parent=1 // pred_region
      %v215 = vld [vmem:[#allocation2] sm:$0x3]
      %v216 = vmul.f32 %v215, 0.00390625
      %v217 = vld [vmem:[#allocation3] sm:$0x3]
      %v218 = vld [vmem:[%s1] sm:$0xff]
      %v219 = vld [vmem:[%s1 + $0x8] sm:$0xff]
      %v220 = vld [vmem:[%s1 + $0x10] sm:$0xff]
      %v221 = vld [vmem:[%s1 + $0x18] sm:$0xff]
      %v222 = vld [vmem:[%s2] sm:$0x3]
      %vm223 = vcmask 261120
      %v225 = vsel %vm223, %v216, 0
      %227 = vmatprep.subr.mxu0 0.0
      %228 = vmatpush1.msra.mxu0 %v218
      %229 = vmatprep.subr.mxu0 0.0
      %230 = vmatpush1.msra.mxu0 %v219
      %231 = vmatprep.subr.mxu0 0.0
      %232 = vmatpush1.msra.mxu0 %v220
      %233 = vmatprep.subr.mxu0 0.0
      %234 = vmatpush1.msra.mxu0 %v221
      %235 = vmatprep.subr.mxu0 0.0
      %236 = vmatpush1.msra.mxu0 0.0
      %237 = vmatprep.subr.mxu0 0.0
      %238 = vmatpush1.msra.mxu0 0.0
      %239 = vmatprep.subr.mxu0 0.0
      %240 = vmatpush1.msra.mxu0 0.0
      %241 = vmatprep.subr.mxu0 0.0
      %242 = vmatpush1.msra.mxu0 0.0
      %243 = vmatprep.subr.mxu0 0.0
      %244 = vmatpush1.msra.mxu0 0.0
      %245 = vmatprep.subr.mxu0 0.0
      %246 = vmatpush1.msra.mxu0 0.0
      %247 = vmatprep.subr.mxu0 0.0
      %248 = vmatpush1.msra.mxu0 0.0
      %249 = vmatprep.subr.mxu0 0.0
      %250 = vmatpush1.msra.mxu0 0.0
      %251 = vmatprep.subr.mxu0 0.0
      %252 = vmatpush1.msra.mxu0 0.0
      %253 = vmatprep.subr.mxu0 0.0
      %254 = vmatpush1.msra.mxu0 0.0
      %255 = vmatprep.subr.mxu0 0.0
      %256 = vmatpush1.msra.mxu0 0.0
      %257 = vmatprep.subr.mxu0 0.0
      %258 = vmatpush1.msra.mxu0 0.0
      %259 = vmatprep.subr.mxu0 0.0
      %260 = vmatpush1.msra.mxu0 0.0
      %261 = vmatprep.subr.mxu0 0.0
      %262 = vmatpush1.msra.mxu0 0.0
      %263 = vmatprep.subr.mxu0 0.0
      %264 = vmatpush1.msra.mxu0 0.0
      %265 = vmatprep.subr.mxu0 0.0
      %266 = vmatpush1.msra.mxu0 0.0
      %267 = vmatprep.subr.mxu0 0.0
      %268 = vmatpush1.msra.mxu0 0.0
      %269 = vmatprep.subr.mxu0 0.0
      %270 = vmatpush1.msra.mxu0 0.0
      %271 = vmatprep.subr.mxu0 0.0
      %272 = vmatpush1.msra.mxu0 0.0
      %273 = vmatprep.subr.mxu0 0.0
      %274 = vmatpush1.msra.mxu0 0.0
      %275 = vmatprep.subr.mxu0 0.0
      %276 = vmatpush1.msra.mxu0 0.0
      %277 = vmatprep.subr.mxu0 0.0
      %278 = vmatpush1.msra.mxu0 0.0
      %279 = vmatprep.subr.mxu0 0.0
      %280 = vmatpush1.msra.mxu0 0.0
      %281 = vmatprep.subr.mxu0 0.0
      %282 = vmatpush1.msra.mxu0 0.0
      %283 = vmatprep.subr.mxu0 0.0
      %284 = vmatpush1.msra.mxu0 0.0
      %285 = vmatprep.subr.mxu0 0.0
      %286 = vmatpush1.msra.mxu0 0.0
      %287 = vmatprep.subr.mxu0 0.0
      %288 = vmatpush1.msra.mxu0 0.0
      %289 = vmatprep.subr.mxu0 0.0
      %290 = vmatpush1.msra.mxu0 0.0
      %291 = vmatprep.mubr.f32.mxu0 0.0
      %292 = vmatmul.mubr.f32.gmra.mrb[0].mxu0 %v225
      %v293 = vpop.f32.mrb[0].mxu0
      %v294 = vadd.f32 0.0, %v293
      %v295 = vpop.f32.mrb[0].mxu0
      %296 = vdwg.mxu0
      %v297 = vmax.f32 %v294, 0.0
      %v299 = vsel %vm223, %v217, 0
      %301 = vmatprep.subr.mxu0 0.0
      %302 = vmatpush1.msra.mxu0 %v218
      %303 = vmatprep.subr.mxu0 0.0
      %304 = vmatpush1.msra.mxu0 %v219
      %305 = vmatprep.subr.mxu0 0.0
      %306 = vmatpush1.msra.mxu0 %v220
      %307 = vmatprep.subr.mxu0 0.0
      %308 = vmatpush1.msra.mxu0 %v221
      %309 = vmatprep.subr.mxu0 0.0
      %310 = vmatpush1.msra.mxu0 0.0
      %311 = vmatprep.subr.mxu0 0.0
      %312 = vmatpush1.msra.mxu0 0.0
      %313 = vmatprep.subr.mxu0 0.0
      %314 = vmatpush1.msra.mxu0 0.0
      %315 = vmatprep.subr.mxu0 0.0
      %316 = vmatpush1.msra.mxu0 0.0
      %317 = vmatprep.subr.mxu0 0.0
      %318 = vmatpush1.msra.mxu0 0.0
      %319 = vmatprep.subr.mxu0 0.0
      %320 = vmatpush1.msra.mxu0 0.0
      %321 = vmatprep.subr.mxu0 0.0
      %322 = vmatpush1.msra.mxu0 0.0
      %323 = vmatprep.subr.mxu0 0.0
      %324 = vmatpush1.msra.mxu0 0.0
      %325 = vmatprep.subr.mxu0 0.0
      %326 = vmatpush1.msra.mxu0 0.0
      %327 = vmatprep.subr.mxu0 0.0
      %328 = vmatpush1.msra.mxu0 0.0
      %329 = vmatprep.subr.mxu0 0.0
      %330 = vmatpush1.msra.mxu0 0.0
      %331 = vmatprep.subr.mxu0 0.0
      %332 = vmatpush1.msra.mxu0 0.0
      %333 = vmatprep.subr.mxu0 0.0
      %334 = vmatpush1.msra.mxu0 0.0
      %335 = vmatprep.subr.mxu0 0.0
      %336 = vmatpush1.msra.mxu0 0.0
      %337 = vmatprep.subr.mxu0 0.0
      %338 = vmatpush1.msra.mxu0 0.0
      %339 = vmatprep.subr.mxu0 0.0
      %340 = vmatpush1.msra.mxu0 0.0
      %341 = vmatprep.subr.mxu0 0.0
      %342 = vmatpush1.msra.mxu0 0.0
      %343 = vmatprep.subr.mxu0 0.0
      %344 = vmatpush1.msra.mxu0 0.0
      %345 = vmatprep.subr.mxu0 0.0
      %346 = vmatpush1.msra.mxu0 0.0
      %347 = vmatprep.subr.mxu0 0.0
      %348 = vmatpush1.msra.mxu0 0.0
      %349 = vmatprep.subr.mxu0 0.0
      %350 = vmatpush1.msra.mxu0 0.0
      %351 = vmatprep.subr.mxu0 0.0
      %352 = vmatpush1.msra.mxu0 0.0
      %353 = vmatprep.subr.mxu0 0.0
      %354 = vmatpush1.msra.mxu0 0.0
      %355 = vmatprep.subr.mxu0 0.0
      %356 = vmatpush1.msra.mxu0 0.0
      %357 = vmatprep.subr.mxu0 0.0
      %358 = vmatpush1.msra.mxu0 0.0
      %359 = vmatprep.subr.mxu0 0.0
      %360 = vmatpush1.msra.mxu0 0.0
      %361 = vmatprep.subr.mxu0 0.0
      %362 = vmatpush1.msra.mxu0 0.0
      %363 = vmatprep.subr.mxu0 0.0
      %364 = vmatpush1.msra.mxu0 0.0
      %365 = vmatprep.mubr.f32.mxu0 0.0
      %366 = vmatmul.mubr.f32.gmra.mrb[0].mxu0 %v299
      %v367 = vpop.f32.mrb[0].mxu0
      %v368 = vadd.f32 0.0, %v367
      %v369 = vpop.f32.mrb[0].mxu0
      %370 = vdwg.mxu0
      %v371 = vmax.f32 %v368, 0.0
      %vm372 = vcmask 15360
      %v374 = vsel %vm372, %v371, 0
      %vm376 = vcmask 1041408
      %v378 = vsel %vm376, %v222, 0
      %380 = vmatprep.subr.mxu0 0.0
      %381 = vmatpush1.msra.mxu0 %v378
      %382 = vmatprep.subr.mxu0 0.0
      %383 = vmatpush1.msra.mxu0 0.0
      %384 = vmatprep.subr.mxu0 0.0
      %385 = vmatpush1.msra.mxu0 0.0
      %386 = vmatprep.subr.mxu0 0.0
      %387 = vmatpush1.msra.mxu0 0.0
      %388 = vmatprep.subr.mxu0 0.0
      %389 = vmatpush1.msra.mxu0 0.0
      %390 = vmatprep.subr.mxu0 0.0
      %391 = vmatpush1.msra.mxu0 0.0
      %392 = vmatprep.subr.mxu0 0.0
      %393 = vmatpush1.msra.mxu0 0.0
      %394 = vmatprep.subr.mxu0 0.0
      %395 = vmatpush1.msra.mxu0 0.0
      %396 = vmatprep.subr.mxu0 0.0
      %397 = vmatpush1.msra.mxu0 0.0
      %398 = vmatprep.subr.mxu0 0.0
      %399 = vmatpush1.msra.mxu0 0.0
      %400 = vmatprep.subr.mxu0 0.0
      %401 = vmatpush1.msra.mxu0 0.0
      %402 = vmatprep.subr.mxu0 0.0
      %403 = vmatpush1.msra.mxu0 0.0
      %404 = vmatprep.subr.mxu0 0.0
      %405 = vmatpush1.msra.mxu0 0.0
      %406 = vmatprep.subr.mxu0 0.0
      %407 = vmatpush1.msra.mxu0 0.0
      %408 = vmatprep.subr.mxu0 0.0
      %409 = vmatpush1.msra.mxu0 0.0
      %410 = vmatprep.subr.mxu0 0.0
      %411 = vmatpush1.msra.mxu0 0.0
      %412 = vmatprep.subr.mxu0 0.0
      %413 = vmatpush1.msra.mxu0 0.0
      %414 = vmatprep.subr.mxu0 0.0
      %415 = vmatpush1.msra.mxu0 0.0
      %416 = vmatprep.subr.mxu0 0.0
      %417 = vmatpush1.msra.mxu0 0.0
      %418 = vmatprep.subr.mxu0 0.0
      %419 = vmatpush1.msra.mxu0 0.0
      %420 = vmatprep.subr.mxu0 0.0
      %421 = vmatpush1.msra.mxu0 0.0
      %422 = vmatprep.subr.mxu0 0.0
      %423 = vmatpush1.msra.mxu0 0.0
      %424 = vmatprep.subr.mxu0 0.0
      %425 = vmatpush1.msra.mxu0 0.0
      %426 = vmatprep.subr.mxu0 0.0
      %427 = vmatpush1.msra.mxu0 0.0
      %428 = vmatprep.subr.mxu0 0.0
      %429 = vmatpush1.msra.mxu0 0.0
      %430 = vmatprep.subr.mxu0 0.0
      %431 = vmatpush1.msra.mxu0 0.0
      %432 = vmatprep.subr.mxu0 0.0
      %433 = vmatpush1.msra.mxu0 0.0
      %434 = vmatprep.subr.mxu0 0.0
      %435 = vmatpush1.msra.mxu0 0.0
      %436 = vmatprep.subr.mxu0 0.0
      %437 = vmatpush1.msra.mxu0 0.0
      %438 = vmatprep.subr.mxu0 0.0
      %439 = vmatpush1.msra.mxu0 0.0
      %440 = vmatprep.subr.mxu0 0.0
      %441 = vmatpush1.msra.mxu0 0.0
      %442 = vmatprep.subr.mxu0 0.0
      %443 = vmatpush1.msra.mxu0 0.0
      %444 = vmatprep.mubr.f32.mxu0 0.0
      %445 = vmatmul.mubr.f32.gmra.mrb[0].mxu0 %v374
      %v446 = vpop.f32.mrb[0].mxu0
      %v447 = vadd.f32 0.0, %v446
      %v448 = vpop.f32.mrb[0].mxu0
      %449 = vdwg.mxu0
      %v451 = vsel %vm372, %v297, 0
      %453 = vmatprep.subr.mxu0 0.0
      %454 = vmatpush1.msra.mxu0 %v378
      %455 = vmatprep.subr.mxu0 0.0
      %456 = vmatpush1.msra.mxu0 0.0
      %457 = vmatprep.subr.mxu0 0.0
      %458 = vmatpush1.msra.mxu0 0.0
      %459 = vmatprep.subr.mxu0 0.0
      %460 = vmatpush1.msra.mxu0 0.0
      %461 = vmatprep.subr.mxu0 0.0
      %462 = vmatpush1.msra.mxu0 0.0
      %463 = vmatprep.subr.mxu0 0.0
      %464 = vmatpush1.msra.mxu0 0.0
      %465 = vmatprep.subr.mxu0 0.0
      %466 = vmatpush1.msra.mxu0 0.0
      %467 = vmatprep.subr.mxu0 0.0
      %468 = vmatpush1.msra.mxu0 0.0
      %469 = vmatprep.subr.mxu0 0.0
      %470 = vmatpush1.msra.mxu0 0.0
      %471 = vmatprep.subr.mxu0 0.0
      %472 = vmatpush1.msra.mxu0 0.0
      %473 = vmatprep.subr.mxu0 0.0
      %474 = vmatpush1.msra.mxu0 0.0
      %475 = vmatprep.subr.mxu0 0.0
      %476 = vmatpush1.msra.mxu0 0.0
      %477 = vmatprep.subr.mxu0 0.0
      %478 = vmatpush1.msra.mxu0 0.0
      %479 = vmatprep.subr.mxu0 0.0
      %480 = vmatpush1.msra.mxu0 0.0
      %481 = vmatprep.subr.mxu0 0.0
      %482 = vmatpush1.msra.mxu0 0.0
      %483 = vmatprep.subr.mxu0 0.0
      %484 = vmatpush1.msra.mxu0 0.0
      %485 = vmatprep.subr.mxu0 0.0
      %486 = vmatpush1.msra.mxu0 0.0
      %487 = vmatprep.subr.mxu0 0.0
      %488 = vmatpush1.msra.mxu0 0.0
      %489 = vmatprep.subr.mxu0 0.0
      %490 = vmatpush1.msra.mxu0 0.0
      %491 = vmatprep.subr.mxu0 0.0
      %492 = vmatpush1.msra.mxu0 0.0
      %493 = vmatprep.subr.mxu0 0.0
      %494 = vmatpush1.msra.mxu0 0.0
      %495 = vmatprep.subr.mxu0 0.0
      %496 = vmatpush1.msra.mxu0 0.0
      %497 = vmatprep.subr.mxu0 0.0
      %498 = vmatpush1.msra.mxu0 0.0
      %499 = vmatprep.subr.mxu0 0.0
      %500 = vmatpush1.msra.mxu0 0.0
      %501 = vmatprep.subr.mxu0 0.0
      %502 = vmatpush1.msra.mxu0 0.0
      %503 = vmatprep.subr.mxu0 0.0
      %504 = vmatpush1.msra.mxu0 0.0
      %505 = vmatprep.subr.mxu0 0.0
      %506 = vmatpush1.msra.mxu0 0.0
      %507 = vmatprep.subr.mxu0 0.0
      %508 = vmatpush1.msra.mxu0 0.0
      %509 = vmatprep.subr.mxu0 0.0
      %510 = vmatpush1.msra.mxu0 0.0
      %511 = vmatprep.subr.mxu0 0.0
      %512 = vmatpush1.msra.mxu0 0.0
      %513 = vmatprep.subr.mxu0 0.0
      %514 = vmatpush1.msra.mxu0 0.0
      %515 = vmatprep.subr.mxu0 0.0
      %516 = vmatpush1.msra.mxu0 0.0
      %517 = vmatprep.mubr.f32.mxu0 0.0
      %518 = vmatmul.mubr.f32.gmra.mrb[0].mxu0 %v451
      %v519 = vpop.f32.mrb[0].mxu0
      %v520 = vadd.f32 %v447, %v519
      %v521 = vpop.f32.mrb[0].mxu0
      %522 = vdwg.mxu0
      %v523 = vxor.u32 %v520, 2147483648
      %v524 = vmul.f32 %v523, 1.442695
      %v525 = vpow.pop %v524
      %v526 = vadd.f32 %v525, 1.0
      %v527 = vrcp.pop %v526
      %v528 = vmul.f32 1.0, %v527
      %529 = vst.msk [vmem:[#allocation7] sm:$0x3] %vm135, %v528
    $region25: #{tpu_custom_call.1} parent=1 // pred_fallthru
      _
    // Predicated region
    $region26: #{tpu_custom_call.1} parent=1 // pred_check
      _
    $region27: #{tpu_custom_call.1} parent=1 // pred_check_branch
      %531 = sbr.rel (0) target = $region29
    $region28: #{tpu_custom_call.1} parent=1 // pred_region
      %s533 = ssub.s32 32, 32
      %534 = vsyncadd [#allocation6], %s533
      %s536 = sshll.u32 [#allocation7], 4
      %s537 = int_to_ptr.vmem [resolvable:$true] %s536
      %539 = dma.vmem_to_hbm [thread:$0]  %s537, 32, %s3, [#allocation6]
    $region29: #{tpu_custom_call.1} parent=1 // pred_fallthru
      _
    // Predicated region
    $region30: #{tpu_custom_call.1} parent=1 // pred_check
      _
    $region31: #{tpu_custom_call.1} parent=1 // pred_check_branch
      %541 = sbr.rel (0) target = $region33
    $region32: #{tpu_custom_call.1} parent=1 // pred_region
      %542 = dma.done [#allocation6], 32
    $region33: #{tpu_custom_call.1} parent=1 // pred_fallthru
      _
    %543 = vsyncpa [#allocation5], 1
    %544 = vsyncpa [#allocation6], 1

</llo_original>
